<compile_context>
chip_gen: v7x
topology: tpu7x:2x2x1
jax: 0.10.0
libtpu: 0.0.40
codegen_flags: <defaults>
</compile_context>

<pallas_src>
import math
from functools import partial

import jax
import jax.numpy as jnp
from jax.experimental import pallas as pl
from jax.experimental.pallas import tpu as pltpu

_SQRT_2_OVER_PI = math.sqrt(2.0 / math.pi)


def _round_up(x, m):
    return ((x + m - 1) // m) * m


def _gelu_new(y):
    # HF ACT2FN["gelu_new"]: 0.5*y*(1+tanh(sqrt(2/pi)*(y + 0.044715*y^3))), f32 math.
    return 0.5 * y * (1.0 + jnp.tanh(_SQRT_2_OVER_PI * y * (1.0 + 0.044715 * y * y)))


def _layer_norm(y, gamma, beta, eps):
    # Single-pass mean / variance; clamp avoids tiny negative variance from
    # cancellation (matches two-pass result well within f32 tolerance).
    mean = jnp.mean(y, axis=-1, keepdims=True)
    mean_sq = jnp.mean(y * y, axis=-1, keepdims=True)
    var = jnp.maximum(mean_sq - mean * mean, 0.0)
    return (y - mean) * jax.lax.rsqrt(var + eps) * gamma + beta


def _head_transform_kernel(x_ref, w_ref, b_ref, g_ref, beta_ref, o_ref, acc_ref,
                           *, eps, matmul_dtype, num_k):
    # x_ref:     (TR, TK)  row tile of x in its ORIGINAL dtype (cast here, on VPU)
    # w_ref:     (TK, H)   dense weight tile, pre-transposed so y = x @ w (bf16)
    # b_ref:     (1, H)    dense bias (f32)
    # g_ref:     (1, H)    LayerNorm weight (f32)
    # beta_ref:  (1, H)    LayerNorm bias (f32)
    # o_ref:     (TR, H)   output tile
    # acc_ref:   (TR, H)   f32 accumulator scratch (only used when num_k > 1)
    x = x_ref[...].astype(matmul_dtype)
    part = jnp.dot(x, w_ref[...], preferred_element_type=jnp.float32)

    def epilogue(y):
        y = y + b_ref[...]
        y = _gelu_new(y)
        out = _layer_norm(y, g_ref[...], beta_ref[...], eps)
        o_ref[...] = out.astype(o_ref.dtype)

    if num_k == 1:
        # Resident-weight fast path: no accumulator round-trip.
        epilogue(part)
    else:
        k = pl.program_id(1)

        @pl.when(k == 0)
        def _():
            acc_ref[...] = jnp.zeros_like(acc_ref)

        acc_ref[...] += part

        @pl.when(k == num_k - 1)
        def _():
            epilogue(acc_ref[...])


def prepare_head_transform_params(w, b, gamma, beta, *, matmul_dtype=jnp.bfloat16):
    """Hoist the (out,in)->(in,out) weight transpose + matmul-dtype cast out of
    the per-call path. `w` is the PyTorch nn.Linear weight in (out, in) layout."""
    w_t = jnp.asarray(w).T.astype(matmul_dtype)              # (in, out)
    b2d = jnp.asarray(b).reshape(1, -1).astype(jnp.float32)
    g2d = jnp.asarray(gamma).reshape(1, -1).astype(jnp.float32)
    beta2d = jnp.asarray(beta).reshape(1, -1).astype(jnp.float32)
    return w_t, b2d, g2d, beta2d


def t5_encoder_prediction_head_transform(hidden_states, w, b, gamma, beta, *,
                                         eps=1e-12, row_tile=512,
                                         matmul_dtype=jnp.bfloat16, out_dtype=None):
    """hidden_states: [B, S, H]. w: [H, H] (PyTorch Linear weight, out x in).
    For repeated calls, run prepare_head_transform_params() once and call
    t5_encoder_prediction_head_transform_prepared() per step."""
    params = prepare_head_transform_params(w, b, gamma, beta, matmul_dtype=matmul_dtype)
    return t5_encoder_prediction_head_transform_prepared(
        hidden_states, *params, eps=eps, row_tile=row_tile,
        matmul_dtype=matmul_dtype, out_dtype=out_dtype)


def t5_encoder_prediction_head_transform_prepared(hidden_states, w_t, b2d, g2d, beta2d, *,
                                                  eps=1e-12, row_tile=512,
                                                  matmul_dtype=jnp.bfloat16,
                                                  out_dtype=None):
    B, S, H = hidden_states.shape
    rows = B * S
    in_dtype = hidden_states.dtype
    out_dtype = in_dtype if out_dtype is None else out_dtype
    x_bytes = jnp.dtype(in_dtype).itemsize
    o_bytes = jnp.dtype(out_dtype).itemsize
    w_bytes = jnp.dtype(w_t.dtype).itemsize

    # Row tile: multiple of 8 sublanes (x/out stay in their native, typically f32,
    # dtype so (8,128) tiling applies); keep >= 2 grid steps when possible so the
    # "parallel" row axis can shard across both v7x TensorCores.
    sub = 8
    row_tile = max(sub, _round_up(int(row_tile), sub))
    rows_r = _round_up(rows, sub)
    if rows_r > sub:
        row_tile_eff = min(row_tile, max(sub, _round_up(pl.cdiv(rows_r, 2), sub)))
    else:
        row_tile_eff = sub

    # VMEM capacity: 128 MiB on v5e/v6e, 64 MiB per TC on v7x. Never budget the
    # full physical VMEM; leave headroom for double-buffered DMAs / spills.
    try:
        vmem_cap = int(pltpu.get_tpu_info().vmem_capacity_bytes)
    except Exception:
        vmem_cap = 64 << 20
    budget = int(0.75 * vmem_cap)

    def vmem_need(tr, tk):
        nk = H // tk
        w_bufs = 1 if nk == 1 else 2
        return (2 * tr * tk * x_bytes          # x tiles (double-buffered)
                + w_bufs * tk * H * w_bytes    # weight tiles
                + 2 * tr * H * o_bytes         # out tiles (double-buffered)
                + tr * H * 4                   # f32 accumulator scratch
                + 3 * tr * H * 4               # f32 live intermediates (y / norm / out)
                + 3 * H * 4)                   # bias / gamma / beta

    # K-tiling over the input-feature axis only when a resident weight + tiles
    # would not fit the VMEM budget (e.g. H >= ~4K on v7x). k_tile always
    # divides H (initial k_tile == H, only halved while a multiple of 256).
    k_tile = H
    while vmem_need(row_tile_eff, k_tile) > budget:
        if k_tile % 256 == 0:
            k_tile //= 2
        elif row_tile_eff > sub:
            row_tile_eff = max(sub, _round_up(row_tile_eff // 2, sub))
        else:
            break
    num_k = H // k_tile

    row_grid = pl.cdiv(rows, row_tile_eff)   # ragged last block handled by Pallas
    grid = (row_grid, num_k)

    need = vmem_need(row_tile_eff, k_tile)
    vmem_limit = int(min(max(need + (4 << 20), 32 << 20), int(0.85 * vmem_cap)))

    cost = pl.CostEstimate(
        flops=2 * rows * H * H,
        transcendentals=rows * H,                       # one tanh per output element
        bytes_accessed=(rows * H * (x_bytes + o_bytes)
                        + (row_grid if num_k > 1 else 1) * H * H * w_bytes
                        + 3 * H * 4),
    )

    # Pure metadata reshape: no cast, no pad, no extra HBM pass over x.
    x2d = hidden_states.reshape(rows, H)

    # Weight: single-buffered when resident (constant index), streamed otherwise.
    w_mode = {"pipeline_mode": pl.Buffered(1)} if num_k == 1 else {}

    out2d = pl.pallas_call(
        partial(_head_transform_kernel, eps=eps, matmul_dtype=matmul_dtype, num_k=num_k),
        out_shape=jax.ShapeDtypeStruct((rows, H), out_dtype),
        grid_spec=pltpu.PrefetchScalarGridSpec(
            num_scalar_prefetch=0,
            grid=grid,
            in_specs=[
                # x tile: streamed, double-buffered (default).
                pl.BlockSpec((row_tile_eff, k_tile), lambda i, k: (i, k)),
                # dense weight (pre-transposed): resident or K-streamed.
                pl.BlockSpec((k_tile, H), lambda i, k: (k, 0), **w_mode),
                # bias / gamma / beta: constant index -> single-buffered.
                pl.BlockSpec((1, H), lambda i, k: (0, 0), pipeline_mode=pl.Buffered(1)),
                pl.BlockSpec((1, H), lambda i, k: (0, 0), pipeline_mode=pl.Buffered(1)),
                pl.BlockSpec((1, H), lambda i, k: (0, 0), pipeline_mode=pl.Buffered(1)),
            ],
            out_specs=pl.BlockSpec((row_tile_eff, H), lambda i, k: (i, 0)),
            scratch_shapes=[pltpu.VMEM((row_tile_eff, H), jnp.float32)],
        ),
        compiler_params=pltpu.CompilerParams(
            dimension_semantics=("parallel", "arbitrary"),
            vmem_limit_bytes=vmem_limit,
        ),
        cost_estimate=cost,
    )(x2d, w_t, b2d, g2d, beta2d)

    return out2d.reshape(B, S, H)


def _reference(hidden_states, w, b, gamma, beta, *, eps=1e-12, matmul_dtype=jnp.bfloat16):
    # Same matmul precision as the kernel (bf16 operands, f32 accumulation),
    # f32 GELU / LayerNorm.
    x = hidden_states.astype(matmul_dtype)
    wc = w.astype(matmul_dtype)
    y = jnp.einsum("bsh,oh->bso", x, wc, preferred_element_type=jnp.float32)
    y = y + b.astype(jnp.float32)
    c = math.sqrt(2.0 / math.pi)
    y = 0.5 * y * (1.0 + jnp.tanh(c * (y + 0.044715 * y ** 3)))
    mean = jnp.mean(y, axis=-1, keepdims=True)
    var = jnp.mean((y - mean) ** 2, axis=-1, keepdims=True)
    out = (y - mean) * jax.lax.rsqrt(var + eps) * gamma + beta
    return out.astype(hidden_states.dtype)


if __name__ == "__main__":
    B, S, H = 2, 8, 32
    eps = 1e-12

    key = jax.random.PRNGKey(0)
    k_x, k_w, k_b, k_g, k_beta = jax.random.split(key, 5)

    hidden_states = jax.random.normal(k_x, (B, S, H), dtype=jnp.float32)
    # Deterministic synthetic parameters (shapes from module __init__).
    w = jax.random.normal(k_w, (H, H), dtype=jnp.float32) * (1.0 / math.sqrt(H))
    b = jax.random.normal(k_b, (H,), dtype=jnp.float32) * 0.02
    gamma = 1.0 + 0.1 * jax.random.normal(k_g, (H,), dtype=jnp.float32)
    beta = 0.02 * jax.random.normal(k_beta, (H,), dtype=jnp.float32)

    out = t5_encoder_prediction_head_transform(hidden_states, w, b, gamma, beta, eps=eps)
    out = jax.block_until_ready(out)

    ref = _reference(hidden_states, w, b, gamma, beta, eps=eps)
    assert out.shape == (B, S, H)
    assert jnp.allclose(out, ref, atol=2e-3, rtol=2e-3), "mismatch vs reference"

    print("KERNEL_OK")
</pallas_src>

<mosaic_0001>
module attributes {stable_mosaic.version = 11 : i64} {
  func.func @_head_transform_kernel(%arg0: i32, %arg1: i32, %arg2: memref<8x32xf32, #tpu.memory_space<vmem>>, %arg3: memref<32x32xbf16, #tpu.memory_space<vmem>>, %arg4: memref<1x32xf32, #tpu.memory_space<vmem>>, %arg5: memref<1x32xf32, #tpu.memory_space<vmem>>, %arg6: memref<1x32xf32, #tpu.memory_space<vmem>>, %arg7: memref<8x32xf32, #tpu.memory_space<vmem>>, %arg8: memref<8x32xf32, #tpu.memory_space<vmem>>) attributes {dimension_semantics = [#tpu.dimension_semantics<parallel>, #tpu.dimension_semantics<arbitrary>], iteration_bounds = array<i64: 2, 1>, scalar_prefetch = 0 : i64, scratch_operands = 1 : i64, tpu.core_type = #tpu.core_type<tc>, window_params = [{transform_indices = @transform_0, window_bounds = array<i64: 8, 32>}, {pipeline_mode = #tpu.pipeline_mode<synchronous>, transform_indices = @transform_1, window_bounds = array<i64: 32, 32>}, {pipeline_mode = #tpu.pipeline_mode<synchronous>, transform_indices = @transform_2, window_bounds = array<i64: 1, 32>}, {pipeline_mode = #tpu.pipeline_mode<synchronous>, transform_indices = @transform_3, window_bounds = array<i64: 1, 32>}, {pipeline_mode = #tpu.pipeline_mode<synchronous>, transform_indices = @transform_4, window_bounds = array<i64: 1, 32>}, {transform_indices = @transform_5, window_bounds = array<i64: 8, 32>}]} {
    %c0 = arith.constant 0 : index
    %c0_0 = arith.constant 0 : index
    %0 = vector.load %arg2[%c0, %c0_0] : memref<8x32xf32, #tpu.memory_space<vmem>>, vector<8x32xf32>
    %1 = arith.truncf %0 : vector<8x32xf32> to vector<8x32xbf16>
    %c0_1 = arith.constant 0 : index
    %c0_2 = arith.constant 0 : index
    %2 = vector.load %arg3[%c0_1, %c0_2] : memref<32x32xbf16, #tpu.memory_space<vmem>>, vector<32x32xbf16>
    %cst = arith.constant dense<0.000000e+00> : vector<8x32xf32>
    %3 = tpu.matmul %1, %2, %cst {dimension_numbers = #tpu.dot_dimension_numbers<[1], [0], [0], [1], [0, 0, 1, 1], [], []>} : vector<8x32xbf16>, vector<32x32xbf16>, vector<8x32xf32> -> vector<8x32xf32>
    %c0_3 = arith.constant 0 : index
    %c0_4 = arith.constant 0 : index
    %4 = vector.load %arg4[%c0_3, %c0_4] : memref<1x32xf32, #tpu.memory_space<vmem>>, vector<1x32xf32>
    %5 = vector.broadcast %4 : vector<1x32xf32> to vector<8x32xf32>
    %6 = arith.addf %3, %5 : vector<8x32xf32>
    %cst_5 = arith.constant 5.000000e-01 : f32
    %7 = vector.broadcast %cst_5 : f32 to vector<8x32xf32>
    %8 = arith.mulf %7, %6 : vector<8x32xf32>
    %cst_6 = arith.constant 0.797884583 : f32
    %9 = vector.broadcast %cst_6 : f32 to vector<8x32xf32>
    %10 = arith.mulf %9, %6 : vector<8x32xf32>
    %cst_7 = arith.constant 4.471500e-02 : f32
    %11 = vector.broadcast %cst_7 : f32 to vector<8x32xf32>
    %12 = arith.mulf %11, %6 : vector<8x32xf32>
    %13 = arith.mulf %12, %6 : vector<8x32xf32>
    %cst_8 = arith.constant 1.000000e+00 : f32
    %14 = vector.broadcast %cst_8 : f32 to vector<8x32xf32>
    %15 = arith.addf %14, %13 : vector<8x32xf32>
    %16 = arith.mulf %10, %15 : vector<8x32xf32>
    %17 = math.tanh %16 : vector<8x32xf32>
    %cst_9 = arith.constant 1.000000e+00 : f32
    %18 = vector.broadcast %cst_9 : f32 to vector<8x32xf32>
    %19 = arith.addf %18, %17 : vector<8x32xf32>
    %20 = arith.mulf %8, %19 : vector<8x32xf32>
    %c0_10 = arith.constant 0 : index
    %c0_11 = arith.constant 0 : index
    %21 = vector.load %arg5[%c0_10, %c0_11] : memref<1x32xf32, #tpu.memory_space<vmem>>, vector<1x32xf32>
    %c0_12 = arith.constant 0 : index
    %c0_13 = arith.constant 0 : index
    %22 = vector.load %arg6[%c0_12, %c0_13] : memref<1x32xf32, #tpu.memory_space<vmem>>, vector<1x32xf32>
    %cst_14 = arith.constant dense<0.000000e+00> : vector<8xf32>
    %23 = vector.multi_reduction <add>, %20, %cst_14 [1] : vector<8x32xf32> to vector<8xf32>
    %24 = vector.shape_cast %23 : vector<8xf32> to vector<8x1xf32>
    %cst_15 = arith.constant 3.200000e+01 : f32
    %25 = vector.broadcast %cst_15 : f32 to vector<8x1xf32>
    %26 = arith.divf %24, %25 : vector<8x1xf32>
    %27 = arith.mulf %20, %20 : vector<8x32xf32>
    %cst_16 = arith.constant dense<0.000000e+00> : vector<8xf32>
    %28 = vector.multi_reduction <add>, %27, %cst_16 [1] : vector<8x32xf32> to vector<8xf32>
    %29 = vector.shape_cast %28 : vector<8xf32> to vector<8x1xf32>
    %cst_17 = arith.constant 3.200000e+01 : f32
    %30 = vector.broadcast %cst_17 : f32 to vector<8x1xf32>
    %31 = arith.divf %29, %30 : vector<8x1xf32>
    %32 = arith.mulf %26, %26 : vector<8x1xf32>
    %33 = arith.subf %31, %32 : vector<8x1xf32>
    %cst_18 = arith.constant 0.000000e+00 : f32
    %34 = vector.broadcast %cst_18 : f32 to vector<8x1xf32>
    %35 = arith.maximumf %33, %34 : vector<8x1xf32>
    %36 = vector.broadcast %26 : vector<8x1xf32> to vector<8x32xf32>
    %37 = arith.subf %20, %36 : vector<8x32xf32>
    %cst_19 = arith.constant 9.99999996E-13 : f32
    %38 = vector.broadcast %cst_19 : f32 to vector<8x1xf32>
    %39 = arith.addf %35, %38 : vector<8x1xf32>
    %40 = math.rsqrt %39 : vector<8x1xf32>
    %41 = vector.broadcast %40 : vector<8x1xf32> to vector<8x32xf32>
    %42 = arith.mulf %37, %41 : vector<8x32xf32>
    %43 = vector.broadcast %21 : vector<1x32xf32> to vector<8x32xf32>
    %44 = arith.mulf %42, %43 : vector<8x32xf32>
    %45 = vector.broadcast %22 : vector<1x32xf32> to vector<8x32xf32>
    %46 = arith.addf %44, %45 : vector<8x32xf32>
    %c0_20 = arith.constant 0 : index
    %c0_21 = arith.constant 0 : index
    %47 = vector.load %arg7[%c0_20, %c0_21] : memref<8x32xf32, #tpu.memory_space<vmem>>, vector<8x32xf32>
    tpu.vector_store %arg7[%c0_20, %c0_21], %46 {strides = array<i32>} : memref<8x32xf32, #tpu.memory_space<vmem>>, vector<8x32xf32>,
    return
  }
  func.func @transform_0(%arg0: i32, %arg1: i32) -> (i32, i32) {
    %c0_i32 = arith.constant 0 : i32
    return %arg0, %arg1 : i32, i32
  }
  func.func @transform_1(%arg0: i32, %arg1: i32) -> (i32, i32) {
    %c0_i32 = arith.constant 0 : i32
    %c0_i32_0 = arith.constant 0 : i32
    return %arg1, %c0_i32 : i32, i32
  }
  func.func @transform_2(%arg0: i32, %arg1: i32) -> (i32, i32) {
    %c0_i32 = arith.constant 0 : i32
    %c0_i32_0 = arith.constant 0 : i32
    %c0_i32_1 = arith.constant 0 : i32
    return %c0_i32, %c0_i32_0 : i32, i32
  }
  func.func @transform_3(%arg0: i32, %arg1: i32) -> (i32, i32) {
    %c0_i32 = arith.constant 0 : i32
    %c0_i32_0 = arith.constant 0 : i32
    %c0_i32_1 = arith.constant 0 : i32
    return %c0_i32, %c0_i32_0 : i32, i32
  }
  func.func @transform_4(%arg0: i32, %arg1: i32) -> (i32, i32) {
    %c0_i32 = arith.constant 0 : i32
    %c0_i32_0 = arith.constant 0 : i32
    %c0_i32_1 = arith.constant 0 : i32
    return %c0_i32, %c0_i32_0 : i32, i32
  }
  func.func @transform_5(%arg0: i32, %arg1: i32) -> (i32, i32) {
    %c0_i32 = arith.constant 0 : i32
    %c0_i32_0 = arith.constant 0 : i32
    return %arg0, %c0_i32 : i32, i32
  }
}

</mosaic_0001>

<llo_original>
// kernel: tpu_custom_call.1
$region0: #{tpu_custom_call.1}
  #allocation0 [shape = 'u32[]', space=smem, size = 0x4, offset = 0x4, fixed_abs, tag = 'smem constant byte address 0x4 - core index']
  #allocation1 [shape = 'u32[144,128]{1,0:T(1,128)}', space=vmem, size = 0x12000, scoped, tag = 'internal scratch']
  #allocation2 [shape = 'f32[8,32]{1,0:T(8,128)}', space=vmem, size = 0x1000, scoped, tag = 'scratch operand']
  %s0 = inlined_call_operand.hbm [shape: f32[16,32], index: 0, kind: input, shape index: {}]
  %s1 = inlined_call_operand.hbm [shape: bf16[32,32], index: 1, kind: input, shape index: {}]
  %s2 = inlined_call_operand.vmem [shape: f32[1,32], index: 2, kind: input, shape index: {}]
  %s3 = inlined_call_operand.vmem [shape: f32[1,32], index: 3, kind: input, shape index: {}]
  %s4 = inlined_call_operand.vmem [shape: f32[1,32], index: 4, kind: input, shape index: {}]
  %s5 = inlined_call_operand.hbm [shape: f32[16,32], index: 5, kind: output, shape index: {}]
  %s6 = sld [smem:[#allocation0]]
  $region61: #{tpu_custom_call.1} parent=0
    _
  %s8 = ssub.s32 1, %s6
  %s9 = scalar_select 0, %s8, %s6
  $region1: #{tpu_custom_call.1} parent=0
    #allocation3 [shape = 'u8[8192]{0}', space=vmem, size = 0x2000, scoped, tag = 'input window, operand 0']
    #allocation4 [shape = 's32[2]{0}', space=sflag, size = 0x8, scoped, tag = 'scoped memory for tpu_custom_call.1']
    #allocation5 [shape = 's32[2]{0}', space=sflag, size = 0x8, scoped, tag = 'scoped memory for tpu_custom_call.1']
    #allocation6 [shape = 'u8[8192]{0}', space=vmem, size = 0x2000, scoped, tag = 'input window, operand 1, single buffered']
    #allocation7 [shape = 's32[1]{0}', space=sflag, size = 0x4, scoped, tag = 'scoped memory for tpu_custom_call.1']
    #allocation8 [shape = 'u8[8192]{0}', space=vmem, size = 0x2000, scoped, tag = 'output window, operand 0']
    %10 = vsyncpa [#allocation4], 0
    %s11 = scalar_lea.sflag [#allocation4], 1
    %12 = vsyncpa %s11, 0
    %13 = vsyncpa [#allocation7], 0
    %14 = vsyncpa [#allocation5], 0
    %s15 = scalar_lea.sflag [#allocation5], 1
    %16 = vsyncpa %s15, 0
    loop: start=0, step=1, limit=4
    $region2: #{tpu_custom_call.1} parent=1 // loop_pre_header
      _
    $region3: #{tpu_custom_call.1} parent=1 // loop_header
      %s18 = sphi 0, %s22
      %p19 = scmp.ge.s32.totalorder %s18, 4
      %s25 = sphi 0, %s37
      %s26 = sphi 0, %s33
      %s27 = sphi 0, %s25
      %s28 = sphi 0, %s26
      %s29 = sphi 0, %s27
      %s30 = sphi 0, %s28
      %s42 = sphi 0, %s44
      %s45 = sphi 0, %s42
      %s46 = sphi 0, %s45
      %s62 = sphi 0, %s46
      %s68 = sphi 0, %s70
      %s71 = sphi 0, %s68
      %s72 = sphi 0, %s71
      %s88 = sphi 0, %s72
      %s92 = sphi 0, %s92
      %s94 = sphi 0, %s92
      %s95 = sphi 0, %s94
      %s109 = sphi 0, %s95
      %s113 = sphi 0, %s113
      %s115 = sphi 0, %s113
      %s116 = sphi 0, %s115
      %s130 = sphi 0, %s116
      %s134 = sphi 0, %s134
      %s136 = sphi 0, %s134
      %s137 = sphi 0, %s136
      %s151 = sphi 0, %s137
      %s157 = sphi 0, %s159
      %s160 = sphi 0, %s157
      %s161 = sphi 0, %s160
      %s177 = sphi 0, %s161
    $region4: #{tpu_custom_call.1} parent=1 // loop_header_branch
      %21 = sbr.rel (%p19) target = $region8
    $region5: #{tpu_custom_call.1} parent=1 // loop_body
      %s23 = ssub.s32 %s18, 1
      %s24 = ssub.s32 %s18, 2
      %s31 = sadd.s32 1, %s26
      %p32 = scmp.ge.s32.totalorder %s31, 1
      %s33 = scalar_select %p32, 0, %s31
      %s34 = sadd.s32 1, %s25
      %s35 = scalar_select %p32, %s34, %s25
      %p36 = scmp.ge.s32.totalorder %s35, 2
      %s37 = scalar_select %p36, 0, %s35
      %s38 = ssub.s32 %s25, %s37
      %s39 = ssub.s32 %s26, %s33
      %s40 = sor.u32 %s38, %s39
      %p41 = scmp.eq.s32.totalorder %s40, 0
      %s43 = sadd.s32 %s42, 1
      %s44 = scalar_select %p41, %s42, %s43
      %p47 = pneg %p41
      %p48 = scmp.eq.s32.totalorder %s18, 1
      %p49 = por %p47, %p48
      %p50 = scmp.ne.s32.totalorder %s42, %s45
      %p51 = scmp.eq.s32.totalorder %s18, 0
      %p52 = por %p50, %p51
      %p53 = scmp.ne.s32.totalorder %s42, %s45
      %p54 = scmp.eq.s32.totalorder %s23, 1
      %p55 = por %p53, %p54
      %p56 = scmp.ne.s32.totalorder %s45, %s46
      %p57 = scmp.eq.s32.totalorder %s23, 0
      %p58 = por %p56, %p57
      %p59 = scmp.ne.s32.totalorder %s45, %s46
      %p60 = scmp.eq.s32.totalorder %s24, 1
      %p61 = por %p59, %p60
      %p63 = scmp.ne.s32.totalorder %s46, %s62
      %p64 = scmp.eq.s32.totalorder %s24, 0
      %p65 = por %p63, %p64
      %s66 = ssub.s32 %s26, %s33
      %p67 = scmp.eq.s32.totalorder %s66, 0
      %s69 = sadd.s32 %s68, 1
      %s70 = scalar_select %p67, %s68, %s69
      %p73 = pneg %p67
      %p74 = scmp.eq.s32.totalorder %s18, 1
      %p75 = por %p73, %p74
      %p76 = scmp.ne.s32.totalorder %s68, %s71
      %p77 = scmp.eq.s32.totalorder %s18, 0
      %p78 = por %p76, %p77
      %p79 = scmp.ne.s32.totalorder %s68, %s71
      %p80 = scmp.eq.s32.totalorder %s23, 1
      %p81 = por %p79, %p80
      %p82 = scmp.ne.s32.totalorder %s71, %s72
      %p83 = scmp.eq.s32.totalorder %s23, 0
      %p84 = por %p82, %p83
      %p85 = scmp.ne.s32.totalorder %s71, %s72
      %p86 = scmp.eq.s32.totalorder %s24, 1
      %p87 = por %p85, %p86
      %p89 = scmp.ne.s32.totalorder %s72, %s88
      %p90 = scmp.eq.s32.totalorder %s24, 0
      %p91 = por %p89, %p90
      %s93 = sadd.s32 %s92, 1
      %p96 = scmp.eq.s32.totalorder %s18, 1
      %p97 = scmp.ne.s32.totalorder %s92, %s94
      %p98 = scmp.eq.s32.totalorder %s18, 0
      %p99 = por %p97, %p98
      %p100 = scmp.ne.s32.totalorder %s92, %s94
      %p101 = scmp.eq.s32.totalorder %s23, 1
      %p102 = por %p100, %p101
      %p103 = scmp.ne.s32.totalorder %s94, %s95
      %p104 = scmp.eq.s32.totalorder %s23, 0
      %p105 = por %p103, %p104
      %p106 = scmp.ne.s32.totalorder %s94, %s95
      %p107 = scmp.eq.s32.totalorder %s24, 1
      %p108 = por %p106, %p107
      %p110 = scmp.ne.s32.totalorder %s95, %s109
      %p111 = scmp.eq.s32.totalorder %s24, 0
      %p112 = por %p110, %p111
      %s114 = sadd.s32 %s113, 1
      %p117 = scmp.eq.s32.totalorder %s18, 1
      %p118 = scmp.ne.s32.totalorder %s113, %s115
      %p119 = scmp.eq.s32.totalorder %s18, 0
      %p120 = por %p118, %p119
      %p121 = scmp.ne.s32.totalorder %s113, %s115
      %p122 = scmp.eq.s32.totalorder %s23, 1
      %p123 = por %p121, %p122
      %p124 = scmp.ne.s32.totalorder %s115, %s116
      %p125 = scmp.eq.s32.totalorder %s23, 0
      %p126 = por %p124, %p125
      %p127 = scmp.ne.s32.totalorder %s115, %s116
      %p128 = scmp.eq.s32.totalorder %s24, 1
      %p129 = por %p127, %p128
      %p131 = scmp.ne.s32.totalorder %s116, %s130
      %p132 = scmp.eq.s32.totalorder %s24, 0
      %p133 = por %p131, %p132
      %s135 = sadd.s32 %s134, 1
      %p138 = scmp.eq.s32.totalorder %s18, 1
      %p139 = scmp.ne.s32.totalorder %s134, %s136
      %p140 = scmp.eq.s32.totalorder %s18, 0
      %p141 = por %p139, %p140
      %p142 = scmp.ne.s32.totalorder %s134, %s136
      %p143 = scmp.eq.s32.totalorder %s23, 1
      %p144 = por %p142, %p143
      %p145 = scmp.ne.s32.totalorder %s136, %s137
      %p146 = scmp.eq.s32.totalorder %s23, 0
      %p147 = por %p145, %p146
      %p148 = scmp.ne.s32.totalorder %s136, %s137
      %p149 = scmp.eq.s32.totalorder %s24, 1
      %p150 = por %p148, %p149
      %p152 = scmp.ne.s32.totalorder %s137, %s151
      %p153 = scmp.eq.s32.totalorder %s24, 0
      %p154 = por %p152, %p153
      %s155 = ssub.s32 %s25, %s37
      %p156 = scmp.eq.s32.totalorder %s155, 0
      %s158 = sadd.s32 %s157, 1
      %s159 = scalar_select %p156, %s157, %s158
      %p162 = pneg %p156
      %p163 = scmp.eq.s32.totalorder %s18, 1
      %p164 = por %p162, %p163
      %p165 = scmp.ne.s32.totalorder %s157, %s160
      %p166 = scmp.eq.s32.totalorder %s18, 0
      %p167 = por %p165, %p166
      %p168 = scmp.ne.s32.totalorder %s157, %s160
      %p169 = scmp.eq.s32.totalorder %s23, 1
      %p170 = por %p168, %p169
      %p171 = scmp.ne.s32.totalorder %s160, %s161
      %p172 = scmp.eq.s32.totalorder %s23, 0
      %p173 = por %p171, %p172
      %p174 = scmp.ne.s32.totalorder %s160, %s161
      %p175 = scmp.eq.s32.totalorder %s24, 1
      %p176 = por %p174, %p175
      %p178 = scmp.ne.s32.totalorder %s161, %s177
      %p179 = scmp.eq.s32.totalorder %s24, 0
      %p180 = por %p178, %p179
      %p181 = scmp.le.s32.totalorder 1, %s18
      %p182 = scmp.lt.s32.totalorder %s18, 3
      %p183 = pnand %p181, %p182
      %p184 = pneg %p183
      // Predicated region
      $region9: #{tpu_custom_call.1} parent=5 // pred_check
        _
      $region10: #{tpu_custom_call.1} parent=5 // pred_check_branch
        %186 = sbr.rel (%p183) target = $region12
      $region11: #{tpu_custom_call.1} parent=5 // pred_region
        %s187 = ssub.s32 %s18, 1
        // Predicated region
        $region13: #{tpu_custom_call.1} parent=11 // pred_check
          %p188 = pneg %p84
        $region14: #{tpu_custom_call.1} parent=11 // pred_check_branch
          %190 = sbr.rel (%p188) target = $region16
        $region15: #{tpu_custom_call.1} parent=11 // pred_region
          %s191 = smul.u32 4, %s28
          %s193 = ssub.s32 256, 256
          %194 = vsyncadd [#allocation7], %s193
          %s195 = smul.addr %s191, 64
          %s196 = scalar_lea.hbm %s1, %s195
          %s197 = sshll.u32 [#allocation6], 4
          %s198 = int_to_ptr.vmem [resolvable:$true] %s197
          %203 = dma.hbm_to_vmem [thread:$0]  %s196, 256, %s198, [#allocation7], 64, 64, 4
        $region16: #{tpu_custom_call.1} parent=11 // pred_fallthru
          _
        // Predicated region
        $region17: #{tpu_custom_call.1} parent=11 // pred_check
          %p204 = pneg %p105
        $region18: #{tpu_custom_call.1} parent=11 // pred_check_branch
          %206 = sbr.rel (%p204) target = $region20
        $region19: #{tpu_custom_call.1} parent=11 // pred_region
          _
        $region20: #{tpu_custom_call.1} parent=11 // pred_fallthru
          _
        // Predicated region
        $region21: #{tpu_custom_call.1} parent=11 // pred_check
          %p207 = pneg %p126
        $region22: #{tpu_custom_call.1} parent=11 // pred_check_branch
          %209 = sbr.rel (%p207) target = $region24
        $region23: #{tpu_custom_call.1} parent=11 // pred_region
          _
        $region24: #{tpu_custom_call.1} parent=11 // pred_fallthru
          _
        // Predicated region
        $region25: #{tpu_custom_call.1} parent=11 // pred_check
          %p210 = pneg %p147
        $region26: #{tpu_custom_call.1} parent=11 // pred_check_branch
          %212 = sbr.rel (%p210) target = $region28
        $region27: #{tpu_custom_call.1} parent=11 // pred_region
          _
        $region28: #{tpu_custom_call.1} parent=11 // pred_fallthru
          _
      $region12: #{tpu_custom_call.1} parent=5 // pred_fallthru
        _
      %p213 = scmp.lt.s32.totalorder %s18, 2
      // Predicated region
      $region29: #{tpu_custom_call.1} parent=5 // pred_check
        %p214 = pneg %p213
      $region30: #{tpu_custom_call.1} parent=5 // pred_check_branch
        %216 = sbr.rel (%p214) target = $region32
      $region31: #{tpu_custom_call.1} parent=5 // pred_region
        // Predicated region
        $region33: #{tpu_custom_call.1} parent=31 // pred_check
          %p217 = pneg %p52
        $region34: #{tpu_custom_call.1} parent=31 // pred_check_branch
          %219 = sbr.rel (%p217) target = $region36
        $region35: #{tpu_custom_call.1} parent=31 // pred_region
          %s220 = sand.u32 %s42, 1
          %s221 = scalar_lea.sflag [#allocation4], %s220
          %s222 = sand.u32 %s42, 1
          %s223 = smul.addr %s222, 8
          %s224 = scalar_lea.vmem [#allocation3], %s223
          %s226 = ssub.s32 128, 128
          %227 = vsyncadd %s221, %s226
          %s228 = sadd.s32 %s26, %s25
          %s229 = smul.addr %s228, 128
          %s230 = scalar_lea.hbm %s0, %s229
          %s232 = sshll.u32 %s224, 4
          %s233 = int_to_ptr.vmem [resolvable:$true] %s232
          %235 = dma.hbm_to_vmem [thread:$0]  %s230, 128, %s233, %s221
        $region36: #{tpu_custom_call.1} parent=31 // pred_fallthru
          _
      $region32: #{tpu_custom_call.1} parent=5 // pred_fallthru
        _
      %p236 = scmp.le.s32.totalorder 1, %s18
      %p237 = scmp.lt.s32.totalorder %s18, 3
      %p238 = pnand %p236, %p237
      %p239 = pneg %p238
      // Predicated region
      $region37: #{tpu_custom_call.1} parent=5 // pred_check
        _
      $region38: #{tpu_custom_call.1} parent=5 // pred_check_branch
        %241 = sbr.rel (%p238) target = $region40
      $region39: #{tpu_custom_call.1} parent=5 // pred_region
        %s242 = ssub.s32 %s18, 1
        %s243 = sand.u32 %s45, 1
        %s244 = scalar_lea.sflag [#allocation4], %s243
        %s245 = sand.u32 %s45, 1
        %s246 = smul.addr %s245, 8
        %s247 = scalar_lea.vmem [#allocation3], %s246
        // Predicated region
        $region41: #{tpu_custom_call.1} parent=39 // pred_check
          %p248 = pneg %p58
        $region42: #{tpu_custom_call.1} parent=39 // pred_check_branch
          %250 = sbr.rel (%p248) target = $region44
        $region43: #{tpu_custom_call.1} parent=39 // pred_region
          %251 = dma.done %s244, 128
        $region44: #{tpu_custom_call.1} parent=39 // pred_fallthru
          _
        // Predicated region
        $region45: #{tpu_custom_call.1} parent=39 // pred_check
          %p252 = pneg %p84
        $region46: #{tpu_custom_call.1} parent=39 // pred_check_branch
          %254 = sbr.rel (%p252) target = $region48
        $region47: #{tpu_custom_call.1} parent=39 // pred_region
          %255 = dma.done [#allocation7], 256
        $region48: #{tpu_custom_call.1} parent=39 // pred_fallthru
          _
        %s256 = sand.u32 %s45, 1
        %s257 = scalar_lea.sflag [#allocation4], %s256
        %s258 = sand.u32 %s45, 1
        %s259 = smul.addr %s258, 8
        %s260 = scalar_lea.vmem [#allocation3], %s259
        %p261 = pneg %p58
        %p262 = pneg %p55
        %p263 = pneg %p84
        %p264 = pneg %p81
        %p265 = pneg %p105
        %p266 = pneg %p102
        %p267 = pneg %p126
        %p268 = pneg %p123
        %p269 = pneg %p147
        %p270 = pneg %p144
        %p271 = pneg %p173
        %p272 = pneg %p170
        %s273 = sand.u32 %s160, 1
        %s274 = scalar_lea.sflag [#allocation5], %s273
        %s275 = sand.u32 %s160, 1
        %s276 = smul.addr %s275, 8
        %s277 = scalar_lea.vmem [#allocation8], %s276
        %s278 = smul.u32 4, %s28
        %v280 = vld [vmem:[%s247] sm:$0xff]
        %v281 = vpack.c.bf16 %v280, %v280
        %v282 = vld [vmem:[#allocation6] sm:$0xf]
        %v283 = vld [vmem:[#allocation6 + $0x4] sm:$0xf]
        %v284 = vld [vmem:[#allocation6 + $0x8] sm:$0xf]
        %v285 = vld [vmem:[#allocation6 + $0xc] sm:$0xf]
        %v286 = vld [vmem:[%s2] sm:$0x1]
        %v288 = vlaneseq
        %v289 = vshrl.u32 %v288, 7
        %v290 = vsub.s32 0, %v289
        %v291 = vrot.slane %v286, %v290
        %v297 = vunpack.c.l.b16 %v282
        %v298 = vunpack.c.l.b16 %v283
        %v299 = vunpack.c.l.b16 %v284
        %v300 = vunpack.c.l.b16 %v285
        %v301 = vpack.c.b16 %v298, %v297
        %v302 = vpack.c.b16 %v300, %v299
        %vm305 = vcmask 261120
        %v307 = vsel %vm305, %v281, 0
        %309 = vmatprep.subr.bf16.mxu0 0
        %310 = vmatpush1.bf16.msra.mxu0 %v301
        %311 = vmatprep.subr.bf16.mxu0 0
        %312 = vmatpush1.bf16.msra.mxu0 %v302
        %313 = vmatprep.subr.bf16.mxu0 0
        %314 = vmatpush1.bf16.msra.mxu0 0
        %315 = vmatprep.subr.bf16.mxu0 0
        %316 = vmatpush1.bf16.msra.mxu0 0
        %317 = vmatprep.subr.bf16.mxu0 0
        %318 = vmatpush1.bf16.msra.mxu0 0
        %319 = vmatprep.subr.bf16.mxu0 0
        %320 = vmatpush1.bf16.msra.mxu0 0
        %321 = vmatprep.subr.bf16.mxu0 0
        %322 = vmatpush1.bf16.msra.mxu0 0
        %323 = vmatprep.subr.bf16.mxu0 0
        %324 = vmatpush1.bf16.msra.mxu0 0
        %325 = vmatprep.subr.bf16.mxu0 0
        %326 = vmatpush1.bf16.msra.mxu0 0
        %327 = vmatprep.subr.bf16.mxu0 0
        %328 = vmatpush1.bf16.msra.mxu0 0
        %329 = vmatprep.subr.bf16.mxu0 0
        %330 = vmatpush1.bf16.msra.mxu0 0
        %331 = vmatprep.subr.bf16.mxu0 0
        %332 = vmatpush1.bf16.msra.mxu0 0
        %333 = vmatprep.subr.bf16.mxu0 0
        %334 = vmatpush1.bf16.msra.mxu0 0
        %335 = vmatprep.subr.bf16.mxu0 0
        %336 = vmatpush1.bf16.msra.mxu0 0
        %337 = vmatprep.subr.bf16.mxu0 0
        %338 = vmatpush1.bf16.msra.mxu0 0
        %339 = vmatprep.subr.bf16.mxu0 0
        %340 = vmatpush1.bf16.msra.mxu0 0
        %341 = vmatprep.mubr.bf16.mxu0 0
        %342 = vmatmul.mubr.bf16.gmra.mrb[0].mxu0 %v307
        %v343 = vpop.f32.mrb[0].mxu0
        %v344 = vadd.f32 %v291, %v343
        %v345 = vpop.f32.mrb[0].mxu0
        %v346 = vpop.f32.mrb[0].mxu0
        %v347 = vpop.f32.mrb[0].mxu0
        %348 = vdwg.mxu0
        %v349 = vmul.f32 %v344, 0.5
        %v350 = vmul.f32 %v344, 0.7978846
        %v351 = vmul.f32 %v344, 0.044715
        %v352 = vmul.f32 %v351, %v344
        %v353 = vadd.f32 %v352, 1.0
        %v354 = vmul.f32 %v350, %v353
        %v355 = vtanh.pop %v354
        %v356 = vadd.f32 %v355, 1.0
        %v357 = vmul.f32 %v349, %v356
        %v358 = vld [vmem:[%s3] sm:$0x1]
        %v359 = vld [vmem:[%s4] sm:$0x1]
        %v360 = vsel %vm305, %v357, 0.0
        %361 = vadd.xlane.f32.xlu0 %v360
        %v362 = vpop.xlane.xlu0 %361
        %v363 = vrcp.pop 32.0
        %v364 = vmul.f32 %v362, %v363
        %v365 = vmul.f32 %v357, %v357
        %v366 = vsel %vm305, %v365, 0.0
        %367 = vadd.xlane.f32.xlu0 %v366
        %v368 = vpop.xlane.xlu0 %367
        %v369 = vmul.f32 %v368, %v363
        %v370 = vmul.f32 %v364, %v364
        %v371 = vsub.f32 %v369, %v370
        %v372 = vmax.f32 %v371, 0.0
        %v373 = vsub.f32 %v357, %v364
        %v374 = vadd.f32 %v372, 1e-12
        %v375 = vrsqrt.pop %v374
        %v376 = vmul.f32 %v373, %v375
        %v378 = vlaneseq
        %v379 = vshrl.u32 %v378, 7
        %v380 = vsub.s32 0, %v379
        %v381 = vrot.slane %v358, %v380
        %v383 = vmul.f32 %v376, %v381
        %v385 = vlaneseq
        %v386 = vshrl.u32 %v385, 7
        %v387 = vsub.s32 0, %v386
        %v388 = vrot.slane %v359, %v387
        %v390 = vadd.f32 %v383, %v388
        %391 = vst.msk [vmem:[%s277] sm:$0xff] %vm305, %v390
        %s392 = sand.u32 %s160, 1
        %s393 = scalar_lea.sflag [#allocation5], %s392
        %s394 = sand.u32 %s160, 1
        %s395 = smul.addr %s394, 8
        %s396 = scalar_lea.vmem [#allocation8], %s395
        // Predicated region
        $region49: #{tpu_custom_call.1} parent=39 // pred_check
          %p397 = pneg %p170
        $region50: #{tpu_custom_call.1} parent=39 // pred_check_branch
          %399 = sbr.rel (%p397) target = $region52
        $region51: #{tpu_custom_call.1} parent=39 // pred_region
          %s401 = ssub.s32 128, 128
          %402 = vsyncadd %s393, %s401
          %s403 = smul.addr %s27, 128
          %s404 = scalar_lea.hbm %s5, %s403
          %s406 = sshll.u32 %s396, 4
          %s407 = int_to_ptr.vmem [resolvable:$true] %s406
          %409 = dma.vmem_to_hbm [thread:$0]  %s407, 128, %s404, %s393
        $region52: #{tpu_custom_call.1} parent=39 // pred_fallthru
          _
      $region40: #{tpu_custom_call.1} parent=5 // pred_fallthru
        _
      %p410 = scmp.le.s32.totalorder 2, %s18
      // Predicated region
      $region53: #{tpu_custom_call.1} parent=5 // pred_check
        %p411 = pneg %p410
      $region54: #{tpu_custom_call.1} parent=5 // pred_check_branch
        %413 = sbr.rel (%p411) target = $region56
      $region55: #{tpu_custom_call.1} parent=5 // pred_region
        %s414 = ssub.s32 %s18, 2
        // Predicated region
        $region57: #{tpu_custom_call.1} parent=55 // pred_check
          %p415 = pneg %p176
        $region58: #{tpu_custom_call.1} parent=55 // pred_check_branch
          %417 = sbr.rel (%p415) target = $region60
        $region59: #{tpu_custom_call.1} parent=55 // pred_region
          %s418 = sand.u32 %s161, 1
          %s419 = scalar_lea.sflag [#allocation5], %s418
          %s420 = sand.u32 %s161, 1
          %s421 = smul.addr %s420, 8
          %s422 = scalar_lea.vmem [#allocation8], %s421
          %423 = dma.done %s419, 128
        $region60: #{tpu_custom_call.1} parent=55 // pred_fallthru
          _
      $region56: #{tpu_custom_call.1} parent=5 // pred_fallthru
        _
    $region6: #{tpu_custom_call.1} parent=1 // loop_footer
      %s22 = sadd.s32 1, %s18
    $region7: #{tpu_custom_call.1} parent=1 // loop_footer_branch
      %17 = sbr.rel target = $region3
    $region8: #{tpu_custom_call.1} parent=1 // loop_exit
      _
    %424 = vsyncpa [#allocation4], 1
    %s425 = scalar_lea.sflag [#allocation4], 1
    %426 = vsyncpa %s425, 1
    %427 = vsyncpa [#allocation7], 1
    %428 = vsyncpa [#allocation5], 1
    %s429 = scalar_lea.sflag [#allocation5], 1
    %430 = vsyncpa %s429, 1

</llo_original>
